<compile_context>
chip_gen: v5e
topology: v5e:2x2
jax: 0.10.0
libtpu: 0.0.40
codegen_flags: <defaults>
</compile_context>

<pallas_src>
import functools

import jax
import jax.numpy as jnp
from jax.experimental import pallas as pl
from jax.experimental.pallas import tpu as pltpu


def _bottleneck_kernel(x_ref, w1_ref, b1_ref, w2_ref, b2_ref,
                       w3_ref, b3_ref, o_ref, pad_ref, col_ref,
                       *, H, W, width):
    # One batch element per grid step.  x_ref/o_ref are lane-dense 2D slabs.
    x2d = x_ref[...]                                        # (H*W, Cin) f32

    # ---- conv1x1 (bn1 scale folded) -> bias -> relu ---------------------
    h1 = jnp.dot(x2d.astype(jnp.bfloat16), w1_ref[...],
                 preferred_element_type=jnp.float32)
    h1 = jnp.maximum(h1 + b1_ref[...], 0.0)                 # (H*W, width) f32

    # ---- conv3x3 (stride=1, pad=1, groups=1) as ONE im2col matmul -------
    # Zero only the 1-pixel halo; the interior is fully overwritten every
    # step, so no full-scratch memset is needed and this stays correct even
    # if the (parallel) batch axis is split across TensorCores.
    zrow = jnp.zeros((1, W + 2, width), jnp.float32)
    zcol = jnp.zeros((H + 2, 1, width), jnp.float32)
    pad_ref[0:1, :, :] = zrow
    pad_ref[H + 1:H + 2, :, :] = zrow
    pad_ref[:, 0:1, :] = zcol
    pad_ref[:, W + 1:W + 2, :] = zcol
    pad_ref[1:H + 1, 1:W + 1, :] = h1.reshape(H, W, width)

    # Build im2col (H*W, 9*width); column order (dy, dx, ci) matches the
    # host-side reshape of the HWIO 3x3 weight to (9*width, width).
    t = 0
    for dy in range(3):
        for dx in range(3):
            win = pad_ref[dy:dy + H, dx:dx + W, :].reshape(H * W, width)
            col_ref[:, t * width:(t + 1) * width] = win
            t += 1

    h2 = jnp.dot(col_ref[...].astype(jnp.bfloat16), w2_ref[...],
                 preferred_element_type=jnp.float32)
    h2 = jnp.maximum(h2 + b2_ref[...], 0.0)                 # (H*W, width) f32

    # ---- conv1x1 (bn3 scale folded) -> bias -> residual add -> relu -----
    h3 = jnp.dot(h2.astype(jnp.bfloat16), w3_ref[...],
                 preferred_element_type=jnp.float32)
    o_ref[...] = jnp.maximum(h3 + b3_ref[...] + x2d, 0.0)   # identity = x


def bottleneck_forward(x, w1, s1, b1, w2, s2, b2, w3, s3, b3):
    """x: (N,H,W,Cin) NHWC f32.  w1:(Cin,width), w2:(3,3,width,width) HWIO,
    w3:(width,Cout).  s*/b*: folded BN scale/bias per channel."""
    N, H, W, Cin = x.shape
    width = w1.shape[1]
    Cout = w3.shape[1]
    assert Cin == Cout, "downsample=None requires inplanes == planes*expansion"

    # Host-side prep: fold BN scales into the conv weights, cast weights to
    # bf16 for the MXU, flatten activations to lane-dense (N, H*W, C).
    w1f = (w1 * jnp.reshape(s1, (1, width))).astype(jnp.bfloat16)
    w2f = (w2 * jnp.reshape(s2, (1, 1, 1, width))
           ).reshape(9 * width, width).astype(jnp.bfloat16)
    w3f = (w3 * jnp.reshape(s3, (1, Cout))).astype(jnp.bfloat16)
    b1f = jnp.reshape(b1, (1, width)).astype(jnp.float32)
    b2f = jnp.reshape(b2, (1, width)).astype(jnp.float32)
    b3f = jnp.reshape(b3, (1, Cout)).astype(jnp.float32)
    x_flat = x.reshape(N, H * W, Cin).astype(jnp.float32)

    kernel = functools.partial(_bottleneck_kernel, H=H, W=W, width=width)
    full2 = lambda n: (0, 0)

    out = pl.pallas_call(
        kernel,
        out_shape=jax.ShapeDtypeStruct((N, H * W, Cout), jnp.float32),
        grid_spec=pltpu.PrefetchScalarGridSpec(
            num_scalar_prefetch=0,
            grid=(N,),
            in_specs=[
                pl.BlockSpec((None, H * W, Cin), lambda n: (n, 0, 0)),
                pl.BlockSpec((Cin, width), full2),
                pl.BlockSpec((1, width), full2),
                pl.BlockSpec((9 * width, width), full2),
                pl.BlockSpec((1, width), full2),
                pl.BlockSpec((width, Cout), full2),
                pl.BlockSpec((1, Cout), full2),
            ],
            out_specs=pl.BlockSpec((None, H * W, Cout), lambda n: (n, 0, 0)),
            scratch_shapes=[
                pltpu.VMEM((H + 2, W + 2, width), jnp.float32),   # padded h1
                pltpu.VMEM((H * W, 9 * width), jnp.float32),      # im2col
            ],
        ),
        compiler_params=pltpu.CompilerParams(
            dimension_semantics=("parallel",),
            vmem_limit_bytes=32 * 1024 * 1024),
    )(x_flat, w1f, b1f, w2f, b2f, w3f, b3f)
    return out.reshape(N, H, W, Cout)


# ------------------------- pure-JAX reference ----------------------------
def _ref_forward(x, w1, s1, b1, w2, s2, b2, w3, s3, b3):
    dn = ('NHWC', 'HWIO', 'NHWC')
    h = jax.lax.conv_general_dilated(x, w1[None, None], (1, 1), 'VALID',
                                     dimension_numbers=dn)
    h = jnp.maximum(h * s1 + b1, 0.0)
    h = jax.lax.conv_general_dilated(h, w2, (1, 1), 'SAME',
                                     dimension_numbers=dn)
    h = jnp.maximum(h * s2 + b2, 0.0)
    h = jax.lax.conv_general_dilated(h, w3[None, None], (1, 1), 'VALID',
                                     dimension_numbers=dn)
    h = h * s3 + b3
    return jnp.maximum(h + x, 0.0)


def _fold_bn(gamma, beta, mean, var, eps=1e-5):
    scale = gamma / jnp.sqrt(var + eps)
    bias = beta - mean * scale
    return scale[None, :], bias[None, :]


if __name__ == "__main__":
    # Small config consistent with Bottleneck(expansion=4):
    #   planes=4, base_width=64, groups=1 -> width=4
    #   inplanes = planes*expansion = 16 (so the identity add is valid)
    N, H, W = 2, 8, 8
    planes = 4
    width = planes            # planes * (64/64) * 1
    inplanes = planes * 4     # = Cout
    Cout = planes * 4

    key = jax.random.PRNGKey(0)
    ks = jax.random.split(key, 16)

    x = jax.random.normal(ks[0], (N, H, W, inplanes), jnp.float32)

    w1 = jax.random.normal(ks[1], (inplanes, width), jnp.float32) / jnp.sqrt(inplanes)
    w2 = jax.random.normal(ks[2], (3, 3, width, width), jnp.float32) / jnp.sqrt(9 * width)
    w3 = jax.random.normal(ks[3], (width, Cout), jnp.float32) / jnp.sqrt(width)

    def bn_params(k, c):
        k1, k2, k3, k4 = jax.random.split(k, 4)
        gamma = 1.0 + 0.1 * jax.random.normal(k1, (c,), jnp.float32)
        beta = 0.1 * jax.random.normal(k2, (c,), jnp.float32)
        mean = 0.1 * jax.random.normal(k3, (c,), jnp.float32)
        var = jax.random.uniform(k4, (c,), jnp.float32, 0.5, 1.5)
        return _fold_bn(gamma, beta, mean, var)

    s1, b1 = bn_params(ks[4], width)
    s2, b2 = bn_params(ks[5], width)
    s3, b3 = bn_params(ks[6], Cout)

    out = bottleneck_forward(x, w1, s1, b1, w2, s2, b2, w3, s3, b3)
    out = jax.block_until_ready(out)

    ref = _ref_forward(x, w1, s1, b1, w2, s2, b2, w3, s3, b3)
    assert out.shape == (N, H, W, Cout)
    # Tolerance loosened vs. the previous f32-only kernel because the MXU
    # dots now take bf16 inputs (f32 accumulation).
    assert jnp.allclose(out, ref, rtol=5e-2, atol=5e-2), (
        float(jnp.max(jnp.abs(out - ref))))

    print("KERNEL_OK")
</pallas_src>

<mosaic_0001>
module attributes {stable_mosaic.version = 11 : i64} {
  func.func @_bottleneck_kernel(%arg0: i32, %arg1: memref<1x64x16xf32, #tpu.memory_space<vmem>>, %arg2: memref<16x4xbf16, #tpu.memory_space<vmem>>, %arg3: memref<1x4xf32, #tpu.memory_space<vmem>>, %arg4: memref<36x4xbf16, #tpu.memory_space<vmem>>, %arg5: memref<1x4xf32, #tpu.memory_space<vmem>>, %arg6: memref<4x16xbf16, #tpu.memory_space<vmem>>, %arg7: memref<1x16xf32, #tpu.memory_space<vmem>>, %arg8: memref<1x64x16xf32, #tpu.memory_space<vmem>>, %arg9: memref<10x10x4xf32, #tpu.memory_space<vmem>>, %arg10: memref<64x36xf32, #tpu.memory_space<vmem>>) attributes {dimension_semantics = [#tpu.dimension_semantics<parallel>], iteration_bounds = array<i64: 2>, scalar_prefetch = 0 : i64, scratch_operands = 2 : i64, tpu.core_type = #tpu.core_type<tc>, window_params = [{transform_indices = @transform_0, window_bounds = array<i64: 1, 64, 16>}, {pipeline_mode = #tpu.pipeline_mode<synchronous>, transform_indices = @transform_1, window_bounds = array<i64: 16, 4>}, {pipeline_mode = #tpu.pipeline_mode<synchronous>, transform_indices = @transform_2, window_bounds = array<i64: 1, 4>}, {pipeline_mode = #tpu.pipeline_mode<synchronous>, transform_indices = @transform_3, window_bounds = array<i64: 36, 4>}, {pipeline_mode = #tpu.pipeline_mode<synchronous>, transform_indices = @transform_4, window_bounds = array<i64: 1, 4>}, {pipeline_mode = #tpu.pipeline_mode<synchronous>, transform_indices = @transform_5, window_bounds = array<i64: 4, 16>}, {pipeline_mode = #tpu.pipeline_mode<synchronous>, transform_indices = @transform_6, window_bounds = array<i64: 1, 16>}, {transform_indices = @transform_7, window_bounds = array<i64: 1, 64, 16>}]} {
    %c0 = arith.constant 0 : index
    %c0_0 = arith.constant 0 : index
    %c0_1 = arith.constant 0 : index
    %0 = vector.load %arg1[%c0, %c0_0, %c0_1] : memref<1x64x16xf32, #tpu.memory_space<vmem>>, vector<1x64x16xf32>
    %1 = vector.shape_cast %0 : vector<1x64x16xf32> to vector<64x16xf32>
    %2 = arith.truncf %1 : vector<64x16xf32> to vector<64x16xbf16>
    %c0_2 = arith.constant 0 : index
    %c0_3 = arith.constant 0 : index
    %3 = vector.load %arg2[%c0_2, %c0_3] : memref<16x4xbf16, #tpu.memory_space<vmem>>, vector<16x4xbf16>
    %cst = arith.constant dense<0.000000e+00> : vector<64x4xf32>
    %4 = tpu.matmul %2, %3, %cst {dimension_numbers = #tpu.dot_dimension_numbers<[1], [0], [0], [1], [0, 0, 1, 1], [], []>} : vector<64x16xbf16>, vector<16x4xbf16>, vector<64x4xf32> -> vector<64x4xf32>
    %c0_4 = arith.constant 0 : index
    %c0_5 = arith.constant 0 : index
    %5 = vector.load %arg3[%c0_4, %c0_5] : memref<1x4xf32, #tpu.memory_space<vmem>>, vector<1x4xf32>
    %6 = vector.broadcast %5 : vector<1x4xf32> to vector<64x4xf32>
    %7 = arith.addf %4, %6 : vector<64x4xf32>
    %cst_6 = arith.constant 0.000000e+00 : f32
    %8 = vector.broadcast %cst_6 : f32 to vector<64x4xf32>
    %9 = arith.maximumf %7, %8 : vector<64x4xf32>
    %cst_7 = arith.constant 0.000000e+00 : f32
    %10 = vector.broadcast %cst_7 : f32 to vector<1x10x4xf32>
    %cst_8 = arith.constant 0.000000e+00 : f32
    %11 = vector.broadcast %cst_8 : f32 to vector<10x1x4xf32>
    %c0_9 = arith.constant 0 : index
    %c0_10 = arith.constant 0 : index
    %c0_11 = arith.constant 0 : index
    %12 = vector.load %arg9[%c0_9, %c0_10, %c0_11] : memref<10x10x4xf32, #tpu.memory_space<vmem>>, vector<1x10x4xf32>
    tpu.vector_store %arg9[%c0_9, %c0_10, %c0_11], %10 {strides = array<i32>} : memref<10x10x4xf32, #tpu.memory_space<vmem>>, vector<1x10x4xf32>,
    %c9 = arith.constant 9 : index
    %c0_12 = arith.constant 0 : index
    %c0_13 = arith.constant 0 : index
    %13 = vector.load %arg9[%c9, %c0_12, %c0_13] : memref<10x10x4xf32, #tpu.memory_space<vmem>>, vector<1x10x4xf32>
    tpu.vector_store %arg9[%c9, %c0_12, %c0_13], %10 {strides = array<i32>} : memref<10x10x4xf32, #tpu.memory_space<vmem>>, vector<1x10x4xf32>,
    %c0_14 = arith.constant 0 : index
    %c0_15 = arith.constant 0 : index
    %c0_16 = arith.constant 0 : index
    %14 = vector.load %arg9[%c0_14, %c0_15, %c0_16] : memref<10x10x4xf32, #tpu.memory_space<vmem>>, vector<10x1x4xf32>
    tpu.vector_store %arg9[%c0_14, %c0_15, %c0_16], %11 {strides = array<i32>} : memref<10x10x4xf32, #tpu.memory_space<vmem>>, vector<10x1x4xf32>,
    %c0_17 = arith.constant 0 : index
    %c9_18 = arith.constant 9 : index
    %c0_19 = arith.constant 0 : index
    %15 = vector.load %arg9[%c0_17, %c9_18, %c0_19] : memref<10x10x4xf32, #tpu.memory_space<vmem>>, vector<10x1x4xf32>
    tpu.vector_store %arg9[%c0_17, %c9_18, %c0_19], %11 {strides = array<i32>} : memref<10x10x4xf32, #tpu.memory_space<vmem>>, vector<10x1x4xf32>,
    %16 = vector.shape_cast %9 : vector<64x4xf32> to vector<8x8x4xf32>
    %c1 = arith.constant 1 : index
    %c1_20 = arith.constant 1 : index
    %c0_21 = arith.constant 0 : index
    %17 = vector.load %arg9[%c1, %c1_20, %c0_21] : memref<10x10x4xf32, #tpu.memory_space<vmem>>, vector<8x8x4xf32>
    tpu.vector_store %arg9[%c1, %c1_20, %c0_21], %16 {strides = array<i32>} : memref<10x10x4xf32, #tpu.memory_space<vmem>>, vector<8x8x4xf32>,
    %c0_22 = arith.constant 0 : index
    %c0_23 = arith.constant 0 : index
    %c0_24 = arith.constant 0 : index
    %18 = vector.load %arg9[%c0_22, %c0_23, %c0_24] : memref<10x10x4xf32, #tpu.memory_space<vmem>>, vector<8x8x4xf32>
    %19 = vector.shape_cast %18 : vector<8x8x4xf32> to vector<64x4xf32>
    %c0_25 = arith.constant 0 : index
    %c0_26 = arith.constant 0 : index
    %20 = vector.load %arg10[%c0_25, %c0_26] : memref<64x36xf32, #tpu.memory_space<vmem>>, vector<64x4xf32>
    tpu.vector_store %arg10[%c0_25, %c0_26], %19 {strides = array<i32>} : memref<64x36xf32, #tpu.memory_space<vmem>>, vector<64x4xf32>,
    %c0_27 = arith.constant 0 : index
    %c1_28 = arith.constant 1 : index
    %c0_29 = arith.constant 0 : index
    %21 = vector.load %arg9[%c0_27, %c1_28, %c0_29] : memref<10x10x4xf32, #tpu.memory_space<vmem>>, vector<8x8x4xf32>
    %22 = vector.shape_cast %21 : vector<8x8x4xf32> to vector<64x4xf32>
    %c0_30 = arith.constant 0 : index
    %c4 = arith.constant 4 : index
    %23 = vector.load %arg10[%c0_30, %c4] : memref<64x36xf32, #tpu.memory_space<vmem>>, vector<64x4xf32>
    tpu.vector_store %arg10[%c0_30, %c4], %22 {strides = array<i32>} : memref<64x36xf32, #tpu.memory_space<vmem>>, vector<64x4xf32>,
    %c0_31 = arith.constant 0 : index
    %c2 = arith.constant 2 : index
    %c0_32 = arith.constant 0 : index
    %24 = vector.load %arg9[%c0_31, %c2, %c0_32] : memref<10x10x4xf32, #tpu.memory_space<vmem>>, vector<8x8x4xf32>
    %25 = vector.shape_cast %24 : vector<8x8x4xf32> to vector<64x4xf32>
    %c0_33 = arith.constant 0 : index
    %c8 = arith.constant 8 : index
    %26 = vector.load %arg10[%c0_33, %c8] : memref<64x36xf32, #tpu.memory_space<vmem>>, vector<64x4xf32>
    tpu.vector_store %arg10[%c0_33, %c8], %25 {strides = array<i32>} : memref<64x36xf32, #tpu.memory_space<vmem>>, vector<64x4xf32>,
    %c1_34 = arith.constant 1 : index
    %c0_35 = arith.constant 0 : index
    %c0_36 = arith.constant 0 : index
    %27 = vector.load %arg9[%c1_34, %c0_35, %c0_36] : memref<10x10x4xf32, #tpu.memory_space<vmem>>, vector<8x8x4xf32>
    %28 = vector.shape_cast %27 : vector<8x8x4xf32> to vector<64x4xf32>
    %c0_37 = arith.constant 0 : index
    %c12 = arith.constant 12 : index
    %29 = vector.load %arg10[%c0_37, %c12] : memref<64x36xf32, #tpu.memory_space<vmem>>, vector<64x4xf32>
    tpu.vector_store %arg10[%c0_37, %c12], %28 {strides = array<i32>} : memref<64x36xf32, #tpu.memory_space<vmem>>, vector<64x4xf32>,
    %c1_38 = arith.constant 1 : index
    %c1_39 = arith.constant 1 : index
    %c0_40 = arith.constant 0 : index
    %30 = vector.load %arg9[%c1_38, %c1_39, %c0_40] : memref<10x10x4xf32, #tpu.memory_space<vmem>>, vector<8x8x4xf32>
    %31 = vector.shape_cast %30 : vector<8x8x4xf32> to vector<64x4xf32>
    %c0_41 = arith.constant 0 : index
    %c16 = arith.constant 16 : index
    %32 = vector.load %arg10[%c0_41, %c16] : memref<64x36xf32, #tpu.memory_space<vmem>>, vector<64x4xf32>
    tpu.vector_store %arg10[%c0_41, %c16], %31 {strides = array<i32>} : memref<64x36xf32, #tpu.memory_space<vmem>>, vector<64x4xf32>,
    %c1_42 = arith.constant 1 : index
    %c2_43 = arith.constant 2 : index
    %c0_44 = arith.constant 0 : index
    %33 = vector.load %arg9[%c1_42, %c2_43, %c0_44] : memref<10x10x4xf32, #tpu.memory_space<vmem>>, vector<8x8x4xf32>
    %34 = vector.shape_cast %33 : vector<8x8x4xf32> to vector<64x4xf32>
    %c0_45 = arith.constant 0 : index
    %c20 = arith.constant 20 : index
    %35 = vector.load %arg10[%c0_45, %c20] : memref<64x36xf32, #tpu.memory_space<vmem>>, vector<64x4xf32>
    tpu.vector_store %arg10[%c0_45, %c20], %34 {strides = array<i32>} : memref<64x36xf32, #tpu.memory_space<vmem>>, vector<64x4xf32>,
    %c2_46 = arith.constant 2 : index
    %c0_47 = arith.constant 0 : index
    %c0_48 = arith.constant 0 : index
    %36 = vector.load %arg9[%c2_46, %c0_47, %c0_48] : memref<10x10x4xf32, #tpu.memory_space<vmem>>, vector<8x8x4xf32>
    %37 = vector.shape_cast %36 : vector<8x8x4xf32> to vector<64x4xf32>
    %c0_49 = arith.constant 0 : index
    %c24 = arith.constant 24 : index
    %38 = vector.load %arg10[%c0_49, %c24] : memref<64x36xf32, #tpu.memory_space<vmem>>, vector<64x4xf32>
    tpu.vector_store %arg10[%c0_49, %c24], %37 {strides = array<i32>} : memref<64x36xf32, #tpu.memory_space<vmem>>, vector<64x4xf32>,
    %c2_50 = arith.constant 2 : index
    %c1_51 = arith.constant 1 : index
    %c0_52 = arith.constant 0 : index
    %39 = vector.load %arg9[%c2_50, %c1_51, %c0_52] : memref<10x10x4xf32, #tpu.memory_space<vmem>>, vector<8x8x4xf32>
    %40 = vector.shape_cast %39 : vector<8x8x4xf32> to vector<64x4xf32>
    %c0_53 = arith.constant 0 : index
    %c28 = arith.constant 28 : index
    %41 = vector.load %arg10[%c0_53, %c28] : memref<64x36xf32, #tpu.memory_space<vmem>>, vector<64x4xf32>
    tpu.vector_store %arg10[%c0_53, %c28], %40 {strides = array<i32>} : memref<64x36xf32, #tpu.memory_space<vmem>>, vector<64x4xf32>,
    %c2_54 = arith.constant 2 : index
    %c2_55 = arith.constant 2 : index
    %c0_56 = arith.constant 0 : index
    %42 = vector.load %arg9[%c2_54, %c2_55, %c0_56] : memref<10x10x4xf32, #tpu.memory_space<vmem>>, vector<8x8x4xf32>
    %43 = vector.shape_cast %42 : vector<8x8x4xf32> to vector<64x4xf32>
    %c0_57 = arith.constant 0 : index
    %c32 = arith.constant 32 : index
    %44 = vector.load %arg10[%c0_57, %c32] : memref<64x36xf32, #tpu.memory_space<vmem>>, vector<64x4xf32>
    tpu.vector_store %arg10[%c0_57, %c32], %43 {strides = array<i32>} : memref<64x36xf32, #tpu.memory_space<vmem>>, vector<64x4xf32>,
    %c0_58 = arith.constant 0 : index
    %c0_59 = arith.constant 0 : index
    %45 = vector.load %arg10[%c0_58, %c0_59] : memref<64x36xf32, #tpu.memory_space<vmem>>, vector<64x36xf32>
    %46 = arith.truncf %45 : vector<64x36xf32> to vector<64x36xbf16>
    %c0_60 = arith.constant 0 : index
    %c0_61 = arith.constant 0 : index
    %47 = vector.load %arg4[%c0_60, %c0_61] : memref<36x4xbf16, #tpu.memory_space<vmem>>, vector<36x4xbf16>
    %cst_62 = arith.constant dense<0.000000e+00> : vector<64x4xf32>
    %48 = tpu.matmul %46, %47, %cst_62 {dimension_numbers = #tpu.dot_dimension_numbers<[1], [0], [0], [1], [0, 0, 1, 1], [], []>} : vector<64x36xbf16>, vector<36x4xbf16>, vector<64x4xf32> -> vector<64x4xf32>
    %c0_63 = arith.constant 0 : index
    %c0_64 = arith.constant 0 : index
    %49 = vector.load %arg5[%c0_63, %c0_64] : memref<1x4xf32, #tpu.memory_space<vmem>>, vector<1x4xf32>
    %50 = vector.broadcast %49 : vector<1x4xf32> to vector<64x4xf32>
    %51 = arith.addf %48, %50 : vector<64x4xf32>
    %cst_65 = arith.constant 0.000000e+00 : f32
    %52 = vector.broadcast %cst_65 : f32 to vector<64x4xf32>
    %53 = arith.maximumf %51, %52 : vector<64x4xf32>
    %54 = arith.truncf %53 : vector<64x4xf32> to vector<64x4xbf16>
    %c0_66 = arith.constant 0 : index
    %c0_67 = arith.constant 0 : index
    %55 = vector.load %arg6[%c0_66, %c0_67] : memref<4x16xbf16, #tpu.memory_space<vmem>>, vector<4x16xbf16>
    %cst_68 = arith.constant dense<0.000000e+00> : vector<64x16xf32>
    %56 = tpu.matmul %54, %55, %cst_68 {dimension_numbers = #tpu.dot_dimension_numbers<[1], [0], [0], [1], [0, 0, 1, 1], [], []>} : vector<64x4xbf16>, vector<4x16xbf16>, vector<64x16xf32> -> vector<64x16xf32>
    %c0_69 = arith.constant 0 : index
    %c0_70 = arith.constant 0 : index
    %57 = vector.load %arg7[%c0_69, %c0_70] : memref<1x16xf32, #tpu.memory_space<vmem>>, vector<1x16xf32>
    %58 = vector.broadcast %57 : vector<1x16xf32> to vector<64x16xf32>
    %59 = arith.addf %56, %58 : vector<64x16xf32>
    %60 = arith.addf %59, %1 : vector<64x16xf32>
    %cst_71 = arith.constant 0.000000e+00 : f32
    %61 = vector.broadcast %cst_71 : f32 to vector<64x16xf32>
    %62 = arith.maximumf %60, %61 : vector<64x16xf32>
    %c0_72 = arith.constant 0 : index
    %c0_73 = arith.constant 0 : index
    %c0_74 = arith.constant 0 : index
    %63 = vector.load %arg8[%c0_72, %c0_73, %c0_74] : memref<1x64x16xf32, #tpu.memory_space<vmem>>, vector<1x64x16xf32>
    %64 = vector.shape_cast %63 : vector<1x64x16xf32> to vector<64x16xf32>
    %65 = vector.shape_cast %62 : vector<64x16xf32> to vector<1x64x16xf32>
    tpu.vector_store %arg8[%c0_72, %c0_73, %c0_74], %65 {strides = array<i32>} : memref<1x64x16xf32, #tpu.memory_space<vmem>>, vector<1x64x16xf32>,
    return
  }
  func.func @transform_0(%arg0: i32) -> (i32, i32, i32) {
    %c0_i32 = arith.constant 0 : i32
    %c0_i32_0 = arith.constant 0 : i32
    %c0_i32_1 = arith.constant 0 : i32
    return %arg0, %c0_i32, %c0_i32_0 : i32, i32, i32
  }
  func.func @transform_1(%arg0: i32) -> (i32, i32) {
    %c0_i32 = arith.constant 0 : i32
    %c0_i32_0 = arith.constant 0 : i32
    %c0_i32_1 = arith.constant 0 : i32
    return %c0_i32, %c0_i32_0 : i32, i32
  }
  func.func @transform_2(%arg0: i32) -> (i32, i32) {
    %c0_i32 = arith.constant 0 : i32
    %c0_i32_0 = arith.constant 0 : i32
    %c0_i32_1 = arith.constant 0 : i32
    return %c0_i32, %c0_i32_0 : i32, i32
  }
  func.func @transform_3(%arg0: i32) -> (i32, i32) {
    %c0_i32 = arith.constant 0 : i32
    %c0_i32_0 = arith.constant 0 : i32
    %c0_i32_1 = arith.constant 0 : i32
    return %c0_i32, %c0_i32_0 : i32, i32
  }
  func.func @transform_4(%arg0: i32) -> (i32, i32) {
    %c0_i32 = arith.constant 0 : i32
    %c0_i32_0 = arith.constant 0 : i32
    %c0_i32_1 = arith.constant 0 : i32
    return %c0_i32, %c0_i32_0 : i32, i32
  }
  func.func @transform_5(%arg0: i32) -> (i32, i32) {
    %c0_i32 = arith.constant 0 : i32
    %c0_i32_0 = arith.constant 0 : i32
    %c0_i32_1 = arith.constant 0 : i32
    return %c0_i32, %c0_i32_0 : i32, i32
  }
  func.func @transform_6(%arg0: i32) -> (i32, i32) {
    %c0_i32 = arith.constant 0 : i32
    %c0_i32_0 = arith.constant 0 : i32
    %c0_i32_1 = arith.constant 0 : i32
    return %c0_i32, %c0_i32_0 : i32, i32
  }
  func.func @transform_7(%arg0: i32) -> (i32, i32, i32) {
    %c0_i32 = arith.constant 0 : i32
    %c0_i32_0 = arith.constant 0 : i32
    %c0_i32_1 = arith.constant 0 : i32
    return %arg0, %c0_i32, %c0_i32_0 : i32, i32, i32
  }
}

</mosaic_0001>

<llo_original>
// kernel: tpu_custom_call.1
$region0: #{tpu_custom_call.1}
  #allocation0 [shape = 'u32[]', space=smem, size = 0x4, offset = 0x4, fixed_abs, tag = 'smem constant byte address 0x4 - core index']
  #allocation1 [shape = 'u32[72,128]{1,0:T(1,128)}', space=vmem, size = 0x9000, scoped, tag = 'internal scratch']
  #allocation2 [shape = 'f32[10,10,4]{2,1,0:T(8,128)}', space=vmem, size = 0x14000, scoped, tag = 'scratch operand']
  #allocation3 [shape = 'f32[64,36]{1,0:T(8,128)}', space=vmem, size = 0x8000, scoped, tag = 'scratch operand']
  %s0 = inlined_call_operand.vmem [shape: f32[2,64,16], index: 0, kind: input, shape index: {}]
  %s1 = inlined_call_operand.vmem [shape: bf16[16,4], index: 1, kind: input, shape index: {}]
  %s2 = inlined_call_operand.vmem [shape: f32[1,4], index: 2, kind: input, shape index: {}]
  %s3 = inlined_call_operand.vmem [shape: bf16[36,4], index: 3, kind: input, shape index: {}]
  %s4 = inlined_call_operand.vmem [shape: f32[1,4], index: 4, kind: input, shape index: {}]
  %s5 = inlined_call_operand.vmem [shape: bf16[4,16], index: 5, kind: input, shape index: {}]
  %s6 = inlined_call_operand.vmem [shape: f32[1,16], index: 6, kind: input, shape index: {}]
  %s7 = inlined_call_operand.vmem [shape: f32[2,64,16], index: 7, kind: output, shape index: {}]
  %s8 = sld [smem:[#allocation0]]
  $region61: #{tpu_custom_call.1} parent=0
    _
  %s10 = ssub.s32 1, %s8
  %s11 = scalar_select 0, %s10, %s8
  loop: start=0, step=1, limit=4
  $region2: #{tpu_custom_call.1} parent=0 // loop_pre_header
    _
  $region3: #{tpu_custom_call.1} parent=0 // loop_header
    %s13 = sphi 0, %s17
    %p14 = scmp.ge.s32.totalorder %s13, 4
    %s23 = sphi 0, %s25
    %s26 = sphi 0, %s23
    %s27 = sphi 0, %s26
    %s43 = sphi 0, %s27
    %s47 = sphi 0, %s47
    %s49 = sphi 0, %s47
    %s50 = sphi 0, %s49
    %s64 = sphi 0, %s50
    %s68 = sphi 0, %s68
    %s70 = sphi 0, %s68
    %s71 = sphi 0, %s70
    %s85 = sphi 0, %s71
    %s89 = sphi 0, %s89
    %s91 = sphi 0, %s89
    %s92 = sphi 0, %s91
    %s106 = sphi 0, %s92
    %s110 = sphi 0, %s110
    %s112 = sphi 0, %s110
    %s113 = sphi 0, %s112
    %s127 = sphi 0, %s113
    %s131 = sphi 0, %s131
    %s133 = sphi 0, %s131
    %s134 = sphi 0, %s133
    %s148 = sphi 0, %s134
    %s152 = sphi 0, %s152
    %s154 = sphi 0, %s152
    %s155 = sphi 0, %s154
    %s169 = sphi 0, %s155
    %s175 = sphi 0, %s177
    %s178 = sphi 0, %s175
    %s179 = sphi 0, %s178
    %s195 = sphi 0, %s179
  $region4: #{tpu_custom_call.1} parent=0 // loop_header_branch
    %16 = sbr.rel (%p14) target = $region8
  $region5: #{tpu_custom_call.1} parent=0 // loop_body
    %s18 = ssub.s32 %s13, 1
    %s19 = ssub.s32 %s13, 2
    %s20 = sadd.s32 %s13, 1
    %s21 = ssub.s32 %s13, %s20
    %p22 = scmp.eq.s32.totalorder %s21, 0
    %s24 = sadd.s32 %s23, 1
    %s25 = scalar_select %p22, %s23, %s24
    %p28 = pneg %p22
    %p29 = scmp.eq.s32.totalorder %s13, 1
    %p30 = por %p28, %p29
    %p31 = scmp.ne.s32.totalorder %s23, %s26
    %p32 = scmp.eq.s32.totalorder %s13, 0
    %p33 = por %p31, %p32
    %p34 = scmp.ne.s32.totalorder %s23, %s26
    %p35 = scmp.eq.s32.totalorder %s18, 1
    %p36 = por %p34, %p35
    %p37 = scmp.ne.s32.totalorder %s26, %s27
    %p38 = scmp.eq.s32.totalorder %s18, 0
    %p39 = por %p37, %p38
    %p40 = scmp.ne.s32.totalorder %s26, %s27
    %p41 = scmp.eq.s32.totalorder %s19, 1
    %p42 = por %p40, %p41
    %p44 = scmp.ne.s32.totalorder %s27, %s43
    %p45 = scmp.eq.s32.totalorder %s19, 0
    %p46 = por %p44, %p45
    %s48 = sadd.s32 %s47, 1
    %p51 = scmp.eq.s32.totalorder %s13, 1
    %p52 = scmp.ne.s32.totalorder %s47, %s49
    %p53 = scmp.eq.s32.totalorder %s13, 0
    %p54 = por %p52, %p53
    %p55 = scmp.ne.s32.totalorder %s47, %s49
    %p56 = scmp.eq.s32.totalorder %s18, 1
    %p57 = por %p55, %p56
    %p58 = scmp.ne.s32.totalorder %s49, %s50
    %p59 = scmp.eq.s32.totalorder %s18, 0
    %p60 = por %p58, %p59
    %p61 = scmp.ne.s32.totalorder %s49, %s50
    %p62 = scmp.eq.s32.totalorder %s19, 1
    %p63 = por %p61, %p62
    %p65 = scmp.ne.s32.totalorder %s50, %s64
    %p66 = scmp.eq.s32.totalorder %s19, 0
    %p67 = por %p65, %p66
    %s69 = sadd.s32 %s68, 1
    %p72 = scmp.eq.s32.totalorder %s13, 1
    %p73 = scmp.ne.s32.totalorder %s68, %s70
    %p74 = scmp.eq.s32.totalorder %s13, 0
    %p75 = por %p73, %p74
    %p76 = scmp.ne.s32.totalorder %s68, %s70
    %p77 = scmp.eq.s32.totalorder %s18, 1
    %p78 = por %p76, %p77
    %p79 = scmp.ne.s32.totalorder %s70, %s71
    %p80 = scmp.eq.s32.totalorder %s18, 0
    %p81 = por %p79, %p80
    %p82 = scmp.ne.s32.totalorder %s70, %s71
    %p83 = scmp.eq.s32.totalorder %s19, 1
    %p84 = por %p82, %p83
    %p86 = scmp.ne.s32.totalorder %s71, %s85
    %p87 = scmp.eq.s32.totalorder %s19, 0
    %p88 = por %p86, %p87
    %s90 = sadd.s32 %s89, 1
    %p93 = scmp.eq.s32.totalorder %s13, 1
    %p94 = scmp.ne.s32.totalorder %s89, %s91
    %p95 = scmp.eq.s32.totalorder %s13, 0
    %p96 = por %p94, %p95
    %p97 = scmp.ne.s32.totalorder %s89, %s91
    %p98 = scmp.eq.s32.totalorder %s18, 1
    %p99 = por %p97, %p98
    %p100 = scmp.ne.s32.totalorder %s91, %s92
    %p101 = scmp.eq.s32.totalorder %s18, 0
    %p102 = por %p100, %p101
    %p103 = scmp.ne.s32.totalorder %s91, %s92
    %p104 = scmp.eq.s32.totalorder %s19, 1
    %p105 = por %p103, %p104
    %p107 = scmp.ne.s32.totalorder %s92, %s106
    %p108 = scmp.eq.s32.totalorder %s19, 0
    %p109 = por %p107, %p108
    %s111 = sadd.s32 %s110, 1
    %p114 = scmp.eq.s32.totalorder %s13, 1
    %p115 = scmp.ne.s32.totalorder %s110, %s112
    %p116 = scmp.eq.s32.totalorder %s13, 0
    %p117 = por %p115, %p116
    %p118 = scmp.ne.s32.totalorder %s110, %s112
    %p119 = scmp.eq.s32.totalorder %s18, 1
    %p120 = por %p118, %p119
    %p121 = scmp.ne.s32.totalorder %s112, %s113
    %p122 = scmp.eq.s32.totalorder %s18, 0
    %p123 = por %p121, %p122
    %p124 = scmp.ne.s32.totalorder %s112, %s113
    %p125 = scmp.eq.s32.totalorder %s19, 1
    %p126 = por %p124, %p125
    %p128 = scmp.ne.s32.totalorder %s113, %s127
    %p129 = scmp.eq.s32.totalorder %s19, 0
    %p130 = por %p128, %p129
    %s132 = sadd.s32 %s131, 1
    %p135 = scmp.eq.s32.totalorder %s13, 1
    %p136 = scmp.ne.s32.totalorder %s131, %s133
    %p137 = scmp.eq.s32.totalorder %s13, 0
    %p138 = por %p136, %p137
    %p139 = scmp.ne.s32.totalorder %s131, %s133
    %p140 = scmp.eq.s32.totalorder %s18, 1
    %p141 = por %p139, %p140
    %p142 = scmp.ne.s32.totalorder %s133, %s134
    %p143 = scmp.eq.s32.totalorder %s18, 0
    %p144 = por %p142, %p143
    %p145 = scmp.ne.s32.totalorder %s133, %s134
    %p146 = scmp.eq.s32.totalorder %s19, 1
    %p147 = por %p145, %p146
    %p149 = scmp.ne.s32.totalorder %s134, %s148
    %p150 = scmp.eq.s32.totalorder %s19, 0
    %p151 = por %p149, %p150
    %s153 = sadd.s32 %s152, 1
    %p156 = scmp.eq.s32.totalorder %s13, 1
    %p157 = scmp.ne.s32.totalorder %s152, %s154
    %p158 = scmp.eq.s32.totalorder %s13, 0
    %p159 = por %p157, %p158
    %p160 = scmp.ne.s32.totalorder %s152, %s154
    %p161 = scmp.eq.s32.totalorder %s18, 1
    %p162 = por %p160, %p161
    %p163 = scmp.ne.s32.totalorder %s154, %s155
    %p164 = scmp.eq.s32.totalorder %s18, 0
    %p165 = por %p163, %p164
    %p166 = scmp.ne.s32.totalorder %s154, %s155
    %p167 = scmp.eq.s32.totalorder %s19, 1
    %p168 = por %p166, %p167
    %p170 = scmp.ne.s32.totalorder %s155, %s169
    %p171 = scmp.eq.s32.totalorder %s19, 0
    %p172 = por %p170, %p171
    %s173 = ssub.s32 %s13, %s20
    %p174 = scmp.eq.s32.totalorder %s173, 0
    %s176 = sadd.s32 %s175, 1
    %s177 = scalar_select %p174, %s175, %s176
    %p180 = pneg %p174
    %p181 = scmp.eq.s32.totalorder %s13, 1
    %p182 = por %p180, %p181
    %p183 = scmp.ne.s32.totalorder %s175, %s178
    %p184 = scmp.eq.s32.totalorder %s13, 0
    %p185 = por %p183, %p184
    %p186 = scmp.ne.s32.totalorder %s175, %s178
    %p187 = scmp.eq.s32.totalorder %s18, 1
    %p188 = por %p186, %p187
    %p189 = scmp.ne.s32.totalorder %s178, %s179
    %p190 = scmp.eq.s32.totalorder %s18, 0
    %p191 = por %p189, %p190
    %p192 = scmp.ne.s32.totalorder %s178, %s179
    %p193 = scmp.eq.s32.totalorder %s19, 1
    %p194 = por %p192, %p193
    %p196 = scmp.ne.s32.totalorder %s179, %s195
    %p197 = scmp.eq.s32.totalorder %s19, 0
    %p198 = por %p196, %p197
    %p199 = scmp.le.s32.totalorder 1, %s13
    %p200 = scmp.lt.s32.totalorder %s13, 3
    %p201 = pnand %p199, %p200
    %p202 = pneg %p201
    // Predicated region
    $region9: #{tpu_custom_call.1} parent=5 // pred_check
      _
    $region10: #{tpu_custom_call.1} parent=5 // pred_check_branch
      %204 = sbr.rel (%p201) target = $region12
    $region11: #{tpu_custom_call.1} parent=5 // pred_region
      %s205 = ssub.s32 %s13, 1
      // Predicated region
      $region13: #{tpu_custom_call.1} parent=11 // pred_check
        %p206 = pneg %p60
      $region14: #{tpu_custom_call.1} parent=11 // pred_check_branch
        %208 = sbr.rel (%p206) target = $region16
      $region15: #{tpu_custom_call.1} parent=11 // pred_region
        _
      $region16: #{tpu_custom_call.1} parent=11 // pred_fallthru
        _
      // Predicated region
      $region17: #{tpu_custom_call.1} parent=11 // pred_check
        %p209 = pneg %p81
      $region18: #{tpu_custom_call.1} parent=11 // pred_check_branch
        %211 = sbr.rel (%p209) target = $region20
      $region19: #{tpu_custom_call.1} parent=11 // pred_region
        _
      $region20: #{tpu_custom_call.1} parent=11 // pred_fallthru
        _
      // Predicated region
      $region21: #{tpu_custom_call.1} parent=11 // pred_check
        %p212 = pneg %p102
      $region22: #{tpu_custom_call.1} parent=11 // pred_check_branch
        %214 = sbr.rel (%p212) target = $region24
      $region23: #{tpu_custom_call.1} parent=11 // pred_region
        _
      $region24: #{tpu_custom_call.1} parent=11 // pred_fallthru
        _
      // Predicated region
      $region25: #{tpu_custom_call.1} parent=11 // pred_check
        %p215 = pneg %p123
      $region26: #{tpu_custom_call.1} parent=11 // pred_check_branch
        %217 = sbr.rel (%p215) target = $region28
      $region27: #{tpu_custom_call.1} parent=11 // pred_region
        _
      $region28: #{tpu_custom_call.1} parent=11 // pred_fallthru
        _
      // Predicated region
      $region29: #{tpu_custom_call.1} parent=11 // pred_check
        %p218 = pneg %p144
      $region30: #{tpu_custom_call.1} parent=11 // pred_check_branch
        %220 = sbr.rel (%p218) target = $region32
      $region31: #{tpu_custom_call.1} parent=11 // pred_region
        _
      $region32: #{tpu_custom_call.1} parent=11 // pred_fallthru
        _
      // Predicated region
      $region33: #{tpu_custom_call.1} parent=11 // pred_check
        %p221 = pneg %p165
      $region34: #{tpu_custom_call.1} parent=11 // pred_check_branch
        %223 = sbr.rel (%p221) target = $region36
      $region35: #{tpu_custom_call.1} parent=11 // pred_region
        _
      $region36: #{tpu_custom_call.1} parent=11 // pred_fallthru
        _
    $region12: #{tpu_custom_call.1} parent=5 // pred_fallthru
      _
    %p224 = scmp.lt.s32.totalorder %s13, 2
    // Predicated region
    $region37: #{tpu_custom_call.1} parent=5 // pred_check
      %p225 = pneg %p224
    $region38: #{tpu_custom_call.1} parent=5 // pred_check_branch
      %227 = sbr.rel (%p225) target = $region40
    $region39: #{tpu_custom_call.1} parent=5 // pred_region
      // Predicated region
      $region41: #{tpu_custom_call.1} parent=39 // pred_check
        %p228 = pneg %p33
      $region42: #{tpu_custom_call.1} parent=39 // pred_check_branch
        %230 = sbr.rel (%p228) target = $region44
      $region43: #{tpu_custom_call.1} parent=39 // pred_region
        %p231 = scmp.lt.s32.totalorder %s13, 1
        %s232 = scalar_select %p231, %s13, 1
        %s233 = smul.addr %s232, 8
        %s234 = smul.addr %s233, 8
        %s235 = scalar_lea.vmem %s0, %s234
      $region44: #{tpu_custom_call.1} parent=39 // pred_fallthru
        _
    $region40: #{tpu_custom_call.1} parent=5 // pred_fallthru
      _
    %p236 = scmp.le.s32.totalorder 1, %s13
    %p237 = scmp.lt.s32.totalorder %s13, 3
    %p238 = pnand %p236, %p237
    %p239 = pneg %p238
    // Predicated region
    $region45: #{tpu_custom_call.1} parent=5 // pred_check
      _
    $region46: #{tpu_custom_call.1} parent=5 // pred_check_branch
      %241 = sbr.rel (%p238) target = $region48
    $region47: #{tpu_custom_call.1} parent=5 // pred_region
      %s242 = ssub.s32 %s13, 1
      %p243 = scmp.lt.s32.totalorder %s18, 1
      %s244 = scalar_select %p243, %s18, 1
      %s245 = smul.addr %s244, 8
      %s246 = smul.addr %s245, 8
      %s247 = scalar_lea.vmem %s0, %s246
      %p248 = pneg %p39
      %p249 = pneg %p36
      %p250 = pneg %p60
      %p251 = pneg %p57
      %p252 = pneg %p81
      %p253 = pneg %p78
      %p254 = pneg %p102
      %p255 = pneg %p99
      %p256 = pneg %p123
      %p257 = pneg %p120
      %p258 = pneg %p144
      %p259 = pneg %p141
      %p260 = pneg %p165
      %p261 = pneg %p162
      %p262 = pneg %p191
      %p263 = pneg %p188
      %p264 = scmp.lt.s32.totalorder %s18, 1
      %s265 = scalar_select %p264, %s18, 1
      %s266 = smul.addr %s265, 8
      %s267 = smul.addr %s266, 8
      %s268 = scalar_lea.vmem %s7, %s267
      %p269 = scmp.lt.s32.totalorder %s18, 1
      %s270 = scalar_select %p269, %s18, 1
      %s271 = smul.addr %s270, 8
      %s272 = smul.addr %s271, 8
      %s273 = scalar_lea.vmem %s0, %s272
      %p274 = scmp.lt.s32.totalorder %s18, 1
      %s275 = scalar_select %p274, %s18, 1
      %s276 = smul.addr %s275, 8
      %s277 = smul.addr %s276, 8
      %s278 = scalar_lea.vmem %s7, %s277
      %v280 = vld [vmem:[%s273] sm:$0xff]
      %v281 = vld [vmem:[%s273 + $0x8] sm:$0xff]
      %v282 = vld [vmem:[%s273 + $0x10] sm:$0xff]
      %v283 = vld [vmem:[%s273 + $0x18] sm:$0xff]
      %v284 = vld [vmem:[%s273 + $0x20] sm:$0xff]
      %v285 = vld [vmem:[%s273 + $0x28] sm:$0xff]
      %v286 = vld [vmem:[%s273 + $0x30] sm:$0xff]
      %v287 = vld [vmem:[%s273 + $0x38] sm:$0xff]
      %v288 = vpack.c.bf16 %v281, %v280
      %v289 = vpack.c.bf16 %v283, %v282
      %v290 = vpack.c.bf16 %v285, %v284
      %v291 = vpack.c.bf16 %v287, %v286
      %v292 = vld [vmem:[%s1] sm:$0xf]
      %v293 = vld [vmem:[%s1 + $0x4] sm:$0xf]
      %v294 = vld [vmem:[%s2] sm:$0x1]
      %v296 = vperm.slane %v294, 0
      %v300 = vunpack.c.l.b16 %v292
      %v301 = vunpack.c.l.b16 %v293
      %v302 = vpack.c.b16 %v301, %v300
      %vm304 = vcmask 130048
      %v306 = vsel %vm304, %v288, 0
      %v309 = vsel %vm304, %v289, 0
      %v312 = vsel %vm304, %v290, 0
      %v315 = vsel %vm304, %v291, 0
      %317 = vmatpush.bf16.msra.mxu0 0
      %318 = vmatpush.bf16.msra.mxu0 0
      %319 = vmatpush.bf16.msra.mxu0 0
      %320 = vmatpush.bf16.msra.mxu0 0
      %321 = vmatpush.bf16.msra.mxu0 0
      %322 = vmatpush.bf16.msra.mxu0 0
      %323 = vmatpush.bf16.msra.mxu0 0
      %324 = vmatpush.bf16.msra.mxu0 %v302
      %325 = vmatmul.bf16.gmra.mxu0 %v306
      %v326 = vpop.f32.mrf.mxu0
      %v327 = vadd.f32 %v296, %v326
      %v328 = vpop.f32.mrf.mxu0
      %v329 = vadd.f32 %v296, %v328
      %330 = vmatmul.bf16.gmra.mxu0 %v309
      %v331 = vpop.f32.mrf.mxu0
      %v332 = vadd.f32 %v296, %v331
      %v333 = vpop.f32.mrf.mxu0
      %v334 = vadd.f32 %v296, %v333
      %335 = vmatmul.bf16.gmra.mxu0 %v312
      %v336 = vpop.f32.mrf.mxu0
      %v337 = vadd.f32 %v296, %v336
      %v338 = vpop.f32.mrf.mxu0
      %v339 = vadd.f32 %v296, %v338
      %340 = vmatmul.bf16.gmra.mxu0 %v315
      %v341 = vpop.f32.mrf.mxu0
      %v342 = vadd.f32 %v296, %v341
      %v343 = vpop.f32.mrf.mxu0
      %v344 = vadd.f32 %v296, %v343
      %345 = vdwg.mxu0
      %v346 = vmax.f32 %v327, 0.0
      %v347 = vmax.f32 %v329, 0.0
      %v348 = vmax.f32 %v332, 0.0
      %v349 = vmax.f32 %v334, 0.0
      %v350 = vmax.f32 %v337, 0.0
      %v351 = vmax.f32 %v339, 0.0
      %v352 = vmax.f32 %v342, 0.0
      %v353 = vmax.f32 %v344, 0.0
      %vm354 = vcmask 31744
      %355 = vst.msk [vmem:[#allocation2] sm:$0xff] %vm354, 0.0
      %vm356 = vcmask 25600
      %357 = vst.msk [vmem:[#allocation2 + $0x8] sm:$0x3] %vm356, 0.0
      %s358 = scalar_lea.vmem [#allocation2], 144
      %359 = vst.msk [vmem:[%s358] sm:$0xff] %vm354, 0.0
      %360 = vst.msk [vmem:[%s358 + $0x8] sm:$0x3] %vm356, 0.0
      %vm361 = vcmask 24576
      %362 = vst.msk [vmem:[#allocation2] sm:$0x1] %vm361, 0.0
      %363 = vst.msk [vmem:[#allocation2 + $0x10] sm:$0x1] %vm361, 0.0
      %364 = vst.msk [vmem:[#allocation2 + $0x20] sm:$0x1] %vm361, 0.0
      %365 = vst.msk [vmem:[#allocation2 + $0x30] sm:$0x1] %vm361, 0.0
      %366 = vst.msk [vmem:[#allocation2 + $0x40] sm:$0x1] %vm361, 0.0
      %367 = vst.msk [vmem:[#allocation2 + $0x50] sm:$0x1] %vm361, 0.0
      %368 = vst.msk [vmem:[#allocation2 + $0x60] sm:$0x1] %vm361, 0.0
      %369 = vst.msk [vmem:[#allocation2 + $0x70] sm:$0x1] %vm361, 0.0
      %370 = vst.msk [vmem:[#allocation2 + $0x80] sm:$0x1] %vm361, 0.0
      %371 = vst.msk [vmem:[#allocation2 + $0x90] sm:$0x1] %vm361, 0.0
      %372 = vst.msk [vmem:[#allocation2 + $0x9] sm:$0x1] %vm361, 0.0
      %373 = vst.msk [vmem:[#allocation2 + $0x19] sm:$0x1] %vm361, 0.0
      %374 = vst.msk [vmem:[#allocation2 + $0x29] sm:$0x1] %vm361, 0.0
      %375 = vst.msk [vmem:[#allocation2 + $0x39] sm:$0x1] %vm361, 0.0
      %376 = vst.msk [vmem:[#allocation2 + $0x49] sm:$0x1] %vm361, 0.0
      %377 = vst.msk [vmem:[#allocation2 + $0x59] sm:$0x1] %vm361, 0.0
      %378 = vst.msk [vmem:[#allocation2 + $0x69] sm:$0x1] %vm361, 0.0
      %379 = vst.msk [vmem:[#allocation2 + $0x79] sm:$0x1] %vm361, 0.0
      %380 = vst.msk [vmem:[#allocation2 + $0x89] sm:$0x1] %vm361, 0.0
      %381 = vst.msk [vmem:[#allocation2 + $0x99] sm:$0x1] %vm361, 0.0
      %s382 = scalar_lea.vmem [#allocation2], 16
      %383 = vst.msk [vmem:[%s382 + $0x1] sm:$0xff] %vm354, %v346
      %384 = vst.msk [vmem:[%s382 + $0x11] sm:$0xff] %vm354, %v347
      %385 = vst.msk [vmem:[%s382 + $0x21] sm:$0xff] %vm354, %v348
      %386 = vst.msk [vmem:[%s382 + $0x31] sm:$0xff] %vm354, %v349
      %387 = vst.msk [vmem:[%s382 + $0x41] sm:$0xff] %vm354, %v350
      %388 = vst.msk [vmem:[%s382 + $0x51] sm:$0xff] %vm354, %v351
      %389 = vst.msk [vmem:[%s382 + $0x61] sm:$0xff] %vm354, %v352
      %390 = vst.msk [vmem:[%s382 + $0x71] sm:$0xff] %vm354, %v353
      %v391 = vld [vmem:[#allocation2] sm:$0xff]
      %v392 = vld [vmem:[#allocation2 + $0x10] sm:$0xff]
      %v393 = vld [vmem:[#allocation2 + $0x20] sm:$0xff]
      %v394 = vld [vmem:[#allocation2 + $0x30] sm:$0xff]
      %v395 = vld [vmem:[#allocation2 + $0x40] sm:$0xff]
      %v396 = vld [vmem:[#allocation2 + $0x50] sm:$0xff]
      %v397 = vld [vmem:[#allocation2 + $0x60] sm:$0xff]
      %v398 = vld [vmem:[#allocation2 + $0x70] sm:$0xff]
      %399 = vst.msk [vmem:[#allocation3] sm:$0xff] %vm354, %v391
      %400 = vst.msk [vmem:[#allocation3 + $0x8] sm:$0xff] %vm354, %v392
      %401 = vst.msk [vmem:[#allocation3 + $0x10] sm:$0xff] %vm354, %v393
      %402 = vst.msk [vmem:[#allocation3 + $0x18] sm:$0xff] %vm354, %v394
      %403 = vst.msk [vmem:[#allocation3 + $0x20] sm:$0xff] %vm354, %v395
      %404 = vst.msk [vmem:[#allocation3 + $0x28] sm:$0xff] %vm354, %v396
      %405 = vst.msk [vmem:[#allocation3 + $0x30] sm:$0xff] %vm354, %v397
      %406 = vst.msk [vmem:[#allocation3 + $0x38] sm:$0xff] %vm354, %v398
      %v407 = vld [vmem:[#allocation2 + $0x1] sm:$0xff]
      %v408 = vld [vmem:[#allocation2 + $0x11] sm:$0xff]
      %v409 = vld [vmem:[#allocation2 + $0x21] sm:$0xff]
      %v410 = vld [vmem:[#allocation2 + $0x31] sm:$0xff]
      %v411 = vld [vmem:[#allocation2 + $0x41] sm:$0xff]
      %v412 = vld [vmem:[#allocation2 + $0x51] sm:$0xff]
      %v413 = vld [vmem:[#allocation2 + $0x61] sm:$0xff]
      %v414 = vld [vmem:[#allocation2 + $0x71] sm:$0xff]
      %423 = vrot.lane.b32.xlu0 %v407, 4
      %v424 = vpop.permute.xlu0 %423
      %425 = vrot.lane.b32.xlu0 %v408, 4
      %v426 = vpop.permute.xlu0 %425
      %427 = vrot.lane.b32.xlu0 %v409, 4
      %v428 = vpop.permute.xlu0 %427
      %429 = vrot.lane.b32.xlu0 %v410, 4
      %v430 = vpop.permute.xlu0 %429
      %431 = vrot.lane.b32.xlu0 %v411, 4
      %v432 = vpop.permute.xlu0 %431
      %433 = vrot.lane.b32.xlu0 %v412, 4
      %v434 = vpop.permute.xlu0 %433
      %435 = vrot.lane.b32.xlu0 %v413, 4
      %v436 = vpop.permute.xlu0 %435
      %437 = vrot.lane.b32.xlu0 %v414, 4
      %v438 = vpop.permute.xlu0 %437
      %vm447 = vcmask 64544
      %448 = vst.msk [vmem:[#allocation3] sm:$0xff] %vm447, %v424
      %449 = vst.msk [vmem:[#allocation3 + $0x8] sm:$0xff] %vm447, %v426
      %450 = vst.msk [vmem:[#allocation3 + $0x10] sm:$0xff] %vm447, %v428
      %451 = vst.msk [vmem:[#allocation3 + $0x18] sm:$0xff] %vm447, %v430
      %452 = vst.msk [vmem:[#allocation3 + $0x20] sm:$0xff] %vm447, %v432
      %453 = vst.msk [vmem:[#allocation3 + $0x28] sm:$0xff] %vm447, %v434
      %454 = vst.msk [vmem:[#allocation3 + $0x30] sm:$0xff] %vm447, %v436
      %455 = vst.msk [vmem:[#allocation3 + $0x38] sm:$0xff] %vm447, %v438
      %v456 = vld [vmem:[#allocation2 + $0x2] sm:$0xff]
      %v457 = vld [vmem:[#allocation2 + $0x12] sm:$0xff]
      %v458 = vld [vmem:[#allocation2 + $0x22] sm:$0xff]
      %v459 = vld [vmem:[#allocation2 + $0x32] sm:$0xff]
      %v460 = vld [vmem:[#allocation2 + $0x42] sm:$0xff]
      %v461 = vld [vmem:[#allocation2 + $0x52] sm:$0xff]
      %v462 = vld [vmem:[#allocation2 + $0x62] sm:$0xff]
      %v463 = vld [vmem:[#allocation2 + $0x72] sm:$0xff]
      %472 = vrot.lane.b32.xlu0 %v456, 8
      %v473 = vpop.permute.xlu0 %472
      %474 = vrot.lane.b32.xlu0 %v457, 8
      %v475 = vpop.permute.xlu0 %474
      %476 = vrot.lane.b32.xlu0 %v458, 8
      %v477 = vpop.permute.xlu0 %476
      %478 = vrot.lane.b32.xlu0 %v459, 8
      %v479 = vpop.permute.xlu0 %478
      %480 = vrot.lane.b32.xlu0 %v460, 8
      %v481 = vpop.permute.xlu0 %480
      %482 = vrot.lane.b32.xlu0 %v461, 8
      %v483 = vpop.permute.xlu0 %482
      %484 = vrot.lane.b32.xlu0 %v462, 8
      %v485 = vpop.permute.xlu0 %484
      %486 = vrot.lane.b32.xlu0 %v463, 8
      %v487 = vpop.permute.xlu0 %486
      %vm496 = vcmask 97344
      %497 = vst.msk [vmem:[#allocation3] sm:$0xff] %vm496, %v473
      %498 = vst.msk [vmem:[#allocation3 + $0x8] sm:$0xff] %vm496, %v475
      %499 = vst.msk [vmem:[#allocation3 + $0x10] sm:$0xff] %vm496, %v477
      %500 = vst.msk [vmem:[#allocation3 + $0x18] sm:$0xff] %vm496, %v479
      %501 = vst.msk [vmem:[#allocation3 + $0x20] sm:$0xff] %vm496, %v481
      %502 = vst.msk [vmem:[#allocation3 + $0x28] sm:$0xff] %vm496, %v483
      %503 = vst.msk [vmem:[#allocation3 + $0x30] sm:$0xff] %vm496, %v485
      %504 = vst.msk [vmem:[#allocation3 + $0x38] sm:$0xff] %vm496, %v487
      %v505 = vld [vmem:[%s382] sm:$0xff]
      %v506 = vld [vmem:[%s382 + $0x10] sm:$0xff]
      %v507 = vld [vmem:[%s382 + $0x20] sm:$0xff]
      %v508 = vld [vmem:[%s382 + $0x30] sm:$0xff]
      %v509 = vld [vmem:[%s382 + $0x40] sm:$0xff]
      %v510 = vld [vmem:[%s382 + $0x50] sm:$0xff]
      %v511 = vld [vmem:[%s382 + $0x60] sm:$0xff]
      %v512 = vld [vmem:[%s382 + $0x70] sm:$0xff]
      %521 = vrot.lane.b32.xlu0 %v505, 12
      %v522 = vpop.permute.xlu0 %521
      %523 = vrot.lane.b32.xlu0 %v506, 12
      %v524 = vpop.permute.xlu0 %523
      %525 = vrot.lane.b32.xlu0 %v507, 12
      %v526 = vpop.permute.xlu0 %525
      %527 = vrot.lane.b32.xlu0 %v508, 12
      %v528 = vpop.permute.xlu0 %527
      %529 = vrot.lane.b32.xlu0 %v509, 12
      %v530 = vpop.permute.xlu0 %529
      %531 = vrot.lane.b32.xlu0 %v510, 12
      %v532 = vpop.permute.xlu0 %531
      %533 = vrot.lane.b32.xlu0 %v511, 12
      %v534 = vpop.permute.xlu0 %533
      %535 = vrot.lane.b32.xlu0 %v512, 12
      %v536 = vpop.permute.xlu0 %535
      %vm545 = vcmask 130144
      %546 = vst.msk [vmem:[#allocation3] sm:$0xff] %vm545, %v522
      %547 = vst.msk [vmem:[#allocation3 + $0x8] sm:$0xff] %vm545, %v524
      %548 = vst.msk [vmem:[#allocation3 + $0x10] sm:$0xff] %vm545, %v526
      %549 = vst.msk [vmem:[#allocation3 + $0x18] sm:$0xff] %vm545, %v528
      %550 = vst.msk [vmem:[#allocation3 + $0x20] sm:$0xff] %vm545, %v530
      %551 = vst.msk [vmem:[#allocation3 + $0x28] sm:$0xff] %vm545, %v532
      %552 = vst.msk [vmem:[#allocation3 + $0x30] sm:$0xff] %vm545, %v534
      %553 = vst.msk [vmem:[#allocation3 + $0x38] sm:$0xff] %vm545, %v536
      %v554 = vld [vmem:[%s382 + $0x1] sm:$0xff]
      %v555 = vld [vmem:[%s382 + $0x11] sm:$0xff]
      %v556 = vld [vmem:[%s382 + $0x21] sm:$0xff]
      %v557 = vld [vmem:[%s382 + $0x31] sm:$0xff]
      %v558 = vld [vmem:[%s382 + $0x41] sm:$0xff]
      %v559 = vld [vmem:[%s382 + $0x51] sm:$0xff]
      %v560 = vld [vmem:[%s382 + $0x61] sm:$0xff]
      %v561 = vld [vmem:[%s382 + $0x71] sm:$0xff]
      %570 = vrot.lane.b32.xlu0 %v554, 16
      %v571 = vpop.permute.xlu0 %570
      %572 = vrot.lane.b32.xlu0 %v555, 16
      %v573 = vpop.permute.xlu0 %572
      %574 = vrot.lane.b32.xlu0 %v556, 16
      %v575 = vpop.permute.xlu0 %574
      %576 = vrot.lane.b32.xlu0 %v557, 16
      %v577 = vpop.permute.xlu0 %576
      %578 = vrot.lane.b32.xlu0 %v558, 16
      %v579 = vpop.permute.xlu0 %578
      %580 = vrot.lane.b32.xlu0 %v559, 16
      %v581 = vpop.permute.xlu0 %580
      %582 = vrot.lane.b32.xlu0 %v560, 16
      %v583 = vpop.permute.xlu0 %582
      %584 = vrot.lane.b32.xlu0 %v561, 16
      %v585 = vpop.permute.xlu0 %584
      %vm594 = vcmask 162944
      %595 = vst.msk [vmem:[#allocation3] sm:$0xff] %vm594, %v571
      %596 = vst.msk [vmem:[#allocation3 + $0x8] sm:$0xff] %vm594, %v573
      %597 = vst.msk [vmem:[#allocation3 + $0x10] sm:$0xff] %vm594, %v575
      %598 = vst.msk [vmem:[#allocation3 + $0x18] sm:$0xff] %vm594, %v577
      %599 = vst.msk [vmem:[#allocation3 + $0x20] sm:$0xff] %vm594, %v579
      %600 = vst.msk [vmem:[#allocation3 + $0x28] sm:$0xff] %vm594, %v581
      %601 = vst.msk [vmem:[#allocation3 + $0x30] sm:$0xff] %vm594, %v583
      %602 = vst.msk [vmem:[#allocation3 + $0x38] sm:$0xff] %vm594, %v585
      %v603 = vld [vmem:[%s382 + $0x2] sm:$0xff]
      %v604 = vld [vmem:[%s382 + $0x12] sm:$0xff]
      %v605 = vld [vmem:[%s382 + $0x22] sm:$0xff]
      %v606 = vld [vmem:[%s382 + $0x32] sm:$0xff]
      %v607 = vld [vmem:[%s382 + $0x42] sm:$0xff]
      %v608 = vld [vmem:[%s382 + $0x52] sm:$0xff]
      %v609 = vld [vmem:[%s382 + $0x62] sm:$0xff]
      %v610 = vld [vmem:[%s382 + $0x72] sm:$0xff]
      %619 = vrot.lane.b32.xlu0 %v603, 20
      %v620 = vpop.permute.xlu0 %619
      %621 = vrot.lane.b32.xlu0 %v604, 20
      %v622 = vpop.permute.xlu0 %621
      %623 = vrot.lane.b32.xlu0 %v605, 20
      %v624 = vpop.permute.xlu0 %623
      %625 = vrot.lane.b32.xlu0 %v606, 20
      %v626 = vpop.permute.xlu0 %625
      %627 = vrot.lane.b32.xlu0 %v607, 20
      %v628 = vpop.permute.xlu0 %627
      %629 = vrot.lane.b32.xlu0 %v608, 20
      %v630 = vpop.permute.xlu0 %629
      %631 = vrot.lane.b32.xlu0 %v609, 20
      %v632 = vpop.permute.xlu0 %631
      %633 = vrot.lane.b32.xlu0 %v610, 20
      %v634 = vpop.permute.xlu0 %633
      %vm643 = vcmask 195744
      %644 = vst.msk [vmem:[#allocation3] sm:$0xff] %vm643, %v620
      %645 = vst.msk [vmem:[#allocation3 + $0x8] sm:$0xff] %vm643, %v622
      %646 = vst.msk [vmem:[#allocation3 + $0x10] sm:$0xff] %vm643, %v624
      %647 = vst.msk [vmem:[#allocation3 + $0x18] sm:$0xff] %vm643, %v626
      %648 = vst.msk [vmem:[#allocation3 + $0x20] sm:$0xff] %vm643, %v628
      %649 = vst.msk [vmem:[#allocation3 + $0x28] sm:$0xff] %vm643, %v630
      %650 = vst.msk [vmem:[#allocation3 + $0x30] sm:$0xff] %vm643, %v632
      %651 = vst.msk [vmem:[#allocation3 + $0x38] sm:$0xff] %vm643, %v634
      %s652 = scalar_lea.vmem [#allocation2], 32
      %v653 = vld [vmem:[%s652] sm:$0xff]
      %v654 = vld [vmem:[%s652 + $0x10] sm:$0xff]
      %v655 = vld [vmem:[%s652 + $0x20] sm:$0xff]
      %v656 = vld [vmem:[%s652 + $0x30] sm:$0xff]
      %v657 = vld [vmem:[%s652 + $0x40] sm:$0xff]
      %v658 = vld [vmem:[%s652 + $0x50] sm:$0xff]
      %v659 = vld [vmem:[%s652 + $0x60] sm:$0xff]
      %v660 = vld [vmem:[%s652 + $0x70] sm:$0xff]
      %669 = vrot.lane.b32.xlu0 %v653, 24
      %v670 = vpop.permute.xlu0 %669
      %671 = vrot.lane.b32.xlu0 %v654, 24
      %v672 = vpop.permute.xlu0 %671
      %673 = vrot.lane.b32.xlu0 %v655, 24
      %v674 = vpop.permute.xlu0 %673
      %675 = vrot.lane.b32.xlu0 %v656, 24
      %v676 = vpop.permute.xlu0 %675
      %677 = vrot.lane.b32.xlu0 %v657, 24
      %v678 = vpop.permute.xlu0 %677
      %679 = vrot.lane.b32.xlu0 %v658, 24
      %v680 = vpop.permute.xlu0 %679
      %681 = vrot.lane.b32.xlu0 %v659, 24
      %v682 = vpop.permute.xlu0 %681
      %683 = vrot.lane.b32.xlu0 %v660, 24
      %v684 = vpop.permute.xlu0 %683
      %vm693 = vcmask 228544
      %694 = vst.msk [vmem:[#allocation3] sm:$0xff] %vm693, %v670
      %695 = vst.msk [vmem:[#allocation3 + $0x8] sm:$0xff] %vm693, %v672
      %696 = vst.msk [vmem:[#allocation3 + $0x10] sm:$0xff] %vm693, %v674
      %697 = vst.msk [vmem:[#allocation3 + $0x18] sm:$0xff] %vm693, %v676
      %698 = vst.msk [vmem:[#allocation3 + $0x20] sm:$0xff] %vm693, %v678
      %699 = vst.msk [vmem:[#allocation3 + $0x28] sm:$0xff] %vm693, %v680
      %700 = vst.msk [vmem:[#allocation3 + $0x30] sm:$0xff] %vm693, %v682
      %701 = vst.msk [vmem:[#allocation3 + $0x38] sm:$0xff] %vm693, %v684
      %v702 = vld [vmem:[%s652 + $0x1] sm:$0xff]
      %v703 = vld [vmem:[%s652 + $0x11] sm:$0xff]
      %v704 = vld [vmem:[%s652 + $0x21] sm:$0xff]
      %v705 = vld [vmem:[%s652 + $0x31] sm:$0xff]
      %v706 = vld [vmem:[%s652 + $0x41] sm:$0xff]
      %v707 = vld [vmem:[%s652 + $0x51] sm:$0xff]
      %v708 = vld [vmem:[%s652 + $0x61] sm:$0xff]
      %v709 = vld [vmem:[%s652 + $0x71] sm:$0xff]
      %718 = vrot.lane.b32.xlu0 %v702, 28
      %v719 = vpop.permute.xlu0 %718
      %720 = vrot.lane.b32.xlu0 %v703, 28
      %v721 = vpop.permute.xlu0 %720
      %722 = vrot.lane.b32.xlu0 %v704, 28
      %v723 = vpop.permute.xlu0 %722
      %724 = vrot.lane.b32.xlu0 %v705, 28
      %v725 = vpop.permute.xlu0 %724
      %726 = vrot.lane.b32.xlu0 %v706, 28
      %v727 = vpop.permute.xlu0 %726
      %728 = vrot.lane.b32.xlu0 %v707, 28
      %v729 = vpop.permute.xlu0 %728
      %730 = vrot.lane.b32.xlu0 %v708, 28
      %v731 = vpop.permute.xlu0 %730
      %732 = vrot.lane.b32.xlu0 %v709, 28
      %v733 = vpop.permute.xlu0 %732
      %vm742 = vcmask 261344
      %743 = vst.msk [vmem:[#allocation3] sm:$0xff] %vm742, %v719
      %744 = vst.msk [vmem:[#allocation3 + $0x8] sm:$0xff] %vm742, %v721
      %745 = vst.msk [vmem:[#allocation3 + $0x10] sm:$0xff] %vm742, %v723
      %746 = vst.msk [vmem:[#allocation3 + $0x18] sm:$0xff] %vm742, %v725
      %747 = vst.msk [vmem:[#allocation3 + $0x20] sm:$0xff] %vm742, %v727
      %748 = vst.msk [vmem:[#allocation3 + $0x28] sm:$0xff] %vm742, %v729
      %749 = vst.msk [vmem:[#allocation3 + $0x30] sm:$0xff] %vm742, %v731
      %750 = vst.msk [vmem:[#allocation3 + $0x38] sm:$0xff] %vm742, %v733
      %v751 = vld [vmem:[%s652 + $0x2] sm:$0xff]
      %v752 = vld [vmem:[%s652 + $0x12] sm:$0xff]
      %v753 = vld [vmem:[%s652 + $0x22] sm:$0xff]
      %v754 = vld [vmem:[%s652 + $0x32] sm:$0xff]
      %v755 = vld [vmem:[%s652 + $0x42] sm:$0xff]
      %v756 = vld [vmem:[%s652 + $0x52] sm:$0xff]
      %v757 = vld [vmem:[%s652 + $0x62] sm:$0xff]
      %v758 = vld [vmem:[%s652 + $0x72] sm:$0xff]
      %767 = vrot.lane.b32.xlu0 %v751, 32
      %v768 = vpop.permute.xlu0 %767
      %769 = vrot.lane.b32.xlu0 %v752, 32
      %v770 = vpop.permute.xlu0 %769
      %771 = vrot.lane.b32.xlu0 %v753, 32
      %v772 = vpop.permute.xlu0 %771
      %773 = vrot.lane.b32.xlu0 %v754, 32
      %v774 = vpop.permute.xlu0 %773
      %775 = vrot.lane.b32.xlu0 %v755, 32
      %v776 = vpop.permute.xlu0 %775
      %777 = vrot.lane.b32.xlu0 %v756, 32
      %v778 = vpop.permute.xlu0 %777
      %779 = vrot.lane.b32.xlu0 %v757, 32
      %v780 = vpop.permute.xlu0 %779
      %781 = vrot.lane.b32.xlu0 %v758, 32
      %v782 = vpop.permute.xlu0 %781
      %vm791 = vcmask 294144
      %792 = vst.msk [vmem:[#allocation3] sm:$0xff] %vm791, %v768
      %793 = vst.msk [vmem:[#allocation3 + $0x8] sm:$0xff] %vm791, %v770
      %794 = vst.msk [vmem:[#allocation3 + $0x10] sm:$0xff] %vm791, %v772
      %795 = vst.msk [vmem:[#allocation3 + $0x18] sm:$0xff] %vm791, %v774
      %796 = vst.msk [vmem:[#allocation3 + $0x20] sm:$0xff] %vm791, %v776
      %797 = vst.msk [vmem:[#allocation3 + $0x28] sm:$0xff] %vm791, %v778
      %798 = vst.msk [vmem:[#allocation3 + $0x30] sm:$0xff] %vm791, %v780
      %799 = vst.msk [vmem:[#allocation3 + $0x38] sm:$0xff] %vm791, %v782
      %v800 = vld [vmem:[#allocation3] sm:$0xff]
      %v801 = vld [vmem:[#allocation3 + $0x8] sm:$0xff]
      %v802 = vld [vmem:[#allocation3 + $0x10] sm:$0xff]
      %v803 = vld [vmem:[#allocation3 + $0x18] sm:$0xff]
      %v804 = vld [vmem:[#allocation3 + $0x20] sm:$0xff]
      %v805 = vld [vmem:[#allocation3 + $0x28] sm:$0xff]
      %v806 = vld [vmem:[#allocation3 + $0x30] sm:$0xff]
      %v807 = vld [vmem:[#allocation3 + $0x38] sm:$0xff]
      %v808 = vpack.c.bf16 %v801, %v800
      %v809 = vpack.c.bf16 %v803, %v802
      %v810 = vpack.c.bf16 %v805, %v804
      %v811 = vpack.c.bf16 %v807, %v806
      %v812 = vld [vmem:[%s3] sm:$0xf]
      %v813 = vld [vmem:[%s3 + $0x4] sm:$0xf]
      %v814 = vld [vmem:[%s3 + $0x8] sm:$0xf]
      %v815 = vld [vmem:[%s3 + $0xc] sm:$0xf]
      %v816 = vld [vmem:[%s3 + $0x10] sm:$0x3]
      %v817 = vld [vmem:[%s4] sm:$0x1]
      %v819 = vperm.slane %v817, 0
      %v826 = vunpack.c.l.b16 %v812
      %v827 = vunpack.c.l.b16 %v813
      %v828 = vunpack.c.l.b16 %v814
      %v829 = vunpack.c.l.b16 %v815
      %v830 = vunpack.c.l.b16 %v816
      %v831 = vpack.c.b16 %v827, %v826
      %v832 = vpack.c.b16 %v829, %v828
      %v833 = vpack.c.b16 %v830, %v830
      %vm836 = vcmask 293888
      %v838 = vsel %vm836, %v808, 0
      %v841 = vsel %vm836, %v809, 0
      %v844 = vsel %vm836, %v810, 0
      %v847 = vsel %vm836, %v811, 0
      %vm849 = vcmask 1041408
      %v851 = vsel %vm849, %v833, 0
      %853 = vmatpush.bf16.msra.mxu0 0
      %854 = vmatpush.bf16.msra.mxu0 0
      %855 = vmatpush.bf16.msra.mxu0 0
      %856 = vmatpush.bf16.msra.mxu0 0
      %857 = vmatpush.bf16.msra.mxu0 0
      %858 = vmatpush.bf16.msra.mxu0 %v851
      %859 = vmatpush.bf16.msra.mxu0 %v832
      %860 = vmatpush.bf16.msra.mxu0 %v831
      %861 = vmatmul.bf16.gmra.mxu0 %v838
      %v862 = vpop.f32.mrf.mxu0
      %v863 = vadd.f32 %v819, %v862
      %v864 = vpop.f32.mrf.mxu0
      %v865 = vadd.f32 %v819, %v864
      %866 = vmatmul.bf16.gmra.mxu0 %v841
      %v867 = vpop.f32.mrf.mxu0
      %v868 = vadd.f32 %v819, %v867
      %v869 = vpop.f32.mrf.mxu0
      %v870 = vadd.f32 %v819, %v869
      %871 = vmatmul.bf16.gmra.mxu0 %v844
      %v872 = vpop.f32.mrf.mxu0
      %v873 = vadd.f32 %v819, %v872
      %v874 = vpop.f32.mrf.mxu0
      %v875 = vadd.f32 %v819, %v874
      %876 = vmatmul.bf16.gmra.mxu0 %v847
      %v877 = vpop.f32.mrf.mxu0
      %v878 = vadd.f32 %v819, %v877
      %v879 = vpop.f32.mrf.mxu0
      %v880 = vadd.f32 %v819, %v879
      %881 = vdwg.mxu0
      %v882 = vmax.f32 %v863, 0.0
      %v883 = vmax.f32 %v865, 0.0
      %v884 = vmax.f32 %v868, 0.0
      %v885 = vmax.f32 %v870, 0.0
      %v886 = vmax.f32 %v873, 0.0
      %v887 = vmax.f32 %v875, 0.0
      %v888 = vmax.f32 %v878, 0.0
      %v889 = vmax.f32 %v880, 0.0
      %v890 = vpack.c.bf16 %v883, %v882
      %v891 = vpack.c.bf16 %v885, %v884
      %v892 = vpack.c.bf16 %v887, %v886
      %v893 = vpack.c.bf16 %v889, %v888
      %v894 = vld [vmem:[%s5] sm:$0x3]
      %v895 = vld [vmem:[%s6] sm:$0x1]
      %v897 = vperm.slane %v895, 0
      %v900 = vsel %vm354, %v890, 0
      %v903 = vsel %vm354, %v891, 0
      %v906 = vsel %vm354, %v892, 0
      %v909 = vsel %vm354, %v893, 0
      %v912 = vsel %vm849, %v894, 0
      %914 = vmatpush.bf16.msra.mxu0 0
      %915 = vmatpush.bf16.msra.mxu0 0
      %916 = vmatpush.bf16.msra.mxu0 0
      %917 = vmatpush.bf16.msra.mxu0 0
      %918 = vmatpush.bf16.msra.mxu0 0
      %919 = vmatpush.bf16.msra.mxu0 0
      %920 = vmatpush.bf16.msra.mxu0 0
      %921 = vmatpush.bf16.msra.mxu0 %v912
      %922 = vmatmul.bf16.gmra.mxu0 %v900
      %v923 = vpop.f32.mrf.mxu0
      %v924 = vadd.f32 %v897, %v923
      %v925 = vpop.f32.mrf.mxu0
      %v926 = vadd.f32 %v897, %v925
      %927 = vmatmul.bf16.gmra.mxu0 %v903
      %v928 = vpop.f32.mrf.mxu0
      %v929 = vadd.f32 %v897, %v928
      %v930 = vpop.f32.mrf.mxu0
      %v931 = vadd.f32 %v897, %v930
      %932 = vmatmul.bf16.gmra.mxu0 %v906
      %v933 = vpop.f32.mrf.mxu0
      %v934 = vadd.f32 %v897, %v933
      %v935 = vpop.f32.mrf.mxu0
      %v936 = vadd.f32 %v897, %v935
      %937 = vmatmul.bf16.gmra.mxu0 %v909
      %v938 = vpop.f32.mrf.mxu0
      %v939 = vadd.f32 %v897, %v938
      %v940 = vpop.f32.mrf.mxu0
      %v941 = vadd.f32 %v897, %v940
      %942 = vdwg.mxu0
      %v943 = vadd.f32 %v924, %v280
      %v944 = vadd.f32 %v926, %v281
      %v945 = vadd.f32 %v929, %v282
      %v946 = vadd.f32 %v931, %v283
      %v947 = vadd.f32 %v934, %v284
      %v948 = vadd.f32 %v936, %v285
      %v949 = vadd.f32 %v939, %v286
      %v950 = vadd.f32 %v941, %v287
      %v951 = vmax.f32 %v943, 0.0
      %v952 = vmax.f32 %v944, 0.0
      %v953 = vmax.f32 %v945, 0.0
      %v954 = vmax.f32 %v946, 0.0
      %v955 = vmax.f32 %v947, 0.0
      %v956 = vmax.f32 %v948, 0.0
      %v957 = vmax.f32 %v949, 0.0
      %v958 = vmax.f32 %v950, 0.0
      %959 = vst.msk [vmem:[%s278] sm:$0xff] %vm304, %v951
      %960 = vst.msk [vmem:[%s278 + $0x8] sm:$0xff] %vm304, %v952
      %961 = vst.msk [vmem:[%s278 + $0x10] sm:$0xff] %vm304, %v953
      %962 = vst.msk [vmem:[%s278 + $0x18] sm:$0xff] %vm304, %v954
      %963 = vst.msk [vmem:[%s278 + $0x20] sm:$0xff] %vm304, %v955
      %964 = vst.msk [vmem:[%s278 + $0x28] sm:$0xff] %vm304, %v956
      %965 = vst.msk [vmem:[%s278 + $0x30] sm:$0xff] %vm304, %v957
      %966 = vst.msk [vmem:[%s278 + $0x38] sm:$0xff] %vm304, %v958
      %p967 = scmp.lt.s32.totalorder %s18, 1
      %s968 = scalar_select %p967, %s18, 1
      %s969 = smul.addr %s968, 8
      %s970 = smul.addr %s969, 8
      %s971 = scalar_lea.vmem %s7, %s970
      // Predicated region
      $region49: #{tpu_custom_call.1} parent=47 // pred_check
        %p972 = pneg %p188
      $region50: #{tpu_custom_call.1} parent=47 // pred_check_branch
        %974 = sbr.rel (%p972) target = $region52
      $region51: #{tpu_custom_call.1} parent=47 // pred_region
        _
      $region52: #{tpu_custom_call.1} parent=47 // pred_fallthru
        _
    $region48: #{tpu_custom_call.1} parent=5 // pred_fallthru
      _
    %p975 = scmp.le.s32.totalorder 2, %s13
    // Predicated region
    $region53: #{tpu_custom_call.1} parent=5 // pred_check
      %p976 = pneg %p975
    $region54: #{tpu_custom_call.1} parent=5 // pred_check_branch
      %978 = sbr.rel (%p976) target = $region56
    $region55: #{tpu_custom_call.1} parent=5 // pred_region
      %s979 = ssub.s32 %s13, 2
      // Predicated region
      $region57: #{tpu_custom_call.1} parent=55 // pred_check
        %p980 = pneg %p194
      $region58: #{tpu_custom_call.1} parent=55 // pred_check_branch
        %982 = sbr.rel (%p980) target = $region60
      $region59: #{tpu_custom_call.1} parent=55 // pred_region
        %p983 = scmp.lt.s32.totalorder %s19, 1
        %s984 = scalar_select %p983, %s19, 1
        %s985 = smul.addr %s984, 8
        %s986 = smul.addr %s985, 8
        %s987 = scalar_lea.vmem %s7, %s986
      $region60: #{tpu_custom_call.1} parent=55 // pred_fallthru
        _
    $region56: #{tpu_custom_call.1} parent=5 // pred_fallthru
      _
  $region6: #{tpu_custom_call.1} parent=0 // loop_footer
    %s17 = sadd.s32 1, %s13
  $region7: #{tpu_custom_call.1} parent=0 // loop_footer_branch
    %12 = sbr.rel target = $region3
  $region8: #{tpu_custom_call.1} parent=0 // loop_exit
    _

</llo_original>
